<compile_context>
chip_gen: v5e
topology: v5e:2x2
jax: 0.10.0
libtpu: 0.0.40
codegen_flags: <defaults>
</compile_context>

<pallas_src>
import functools

import jax
import jax.numpy as jnp
from jax import lax
from jax.experimental import pallas as pl
from jax.experimental.pallas import tpu as pltpu


def _mean_pool_kernel(x_ref, o_ref, acc_ref, *, true_s, ts, mask_tail, acc_rows):
    s_idx = pl.program_id(2)
    n_s = pl.num_programs(2)

    @pl.when(s_idx == 0)
    def _init():
        acc_ref[...] = jnp.zeros_like(acc_ref)

    def accumulate(x):
        # x: (ts, TH) f32.  With acc_rows == 8 this is pure vreg-group adds
        # (no cross-sublane XLU work in the steady-state loop).
        if acc_rows == 8:
            acc_ref[...] += jnp.sum(x.reshape(-1, 8, x.shape[-1]), axis=0)
        else:
            acc_ref[...] += jnp.sum(x, axis=0, keepdims=True)

    if mask_tail:
        # Steady-state steps: unmasked accumulate (no iota/compare/select).
        @pl.when(s_idx < n_s - 1)
        def _body_full():
            accumulate(x_ref[0].astype(jnp.float32))

        # Only the ragged last S tile pays for the mask (divide by true S).
        @pl.when(s_idx == n_s - 1)
        def _body_tail():
            x = x_ref[0].astype(jnp.float32)
            row = lax.broadcasted_iota(jnp.int32, x.shape, 0)
            x = jnp.where(s_idx * ts + row < true_s, x, 0.0)
            accumulate(x)
    else:
        accumulate(x_ref[0].astype(jnp.float32))

    @pl.when(s_idx == n_s - 1)
    def _finalize():
        # Single sublane collapse + scale + cast, once per (b, h) tile.
        total = jnp.sum(acc_ref[...], axis=0, keepdims=True)  # (1, TH) f32
        o_ref[...] = (total * (1.0 / true_s))[None].astype(o_ref.dtype)


def _sublane_multiple(dtype_bytes):
    # f32 -> 8, bf16 -> 16, int8/fp8 -> 32 packed sublanes per vreg.
    return max(8, 32 // dtype_bytes)


def _device_tuning():
    """Returns (per-tile byte target, want >= 2 parallel grid steps)."""
    try:
        kind = jax.devices()[0].device_kind.lower()
    except Exception:
        return 4 << 20, False
    if "v5" in kind:
        return 2 << 20, False   # ~0.8 TB/s HBM: ~2 MiB already near roofline
    if "v6" in kind:
        return 4 << 20, False   # 1 TC, ~1.4 TB/s HBM
    return 8 << 20, True        # v7x & newer: ~3.2 TB/s HBM, 2 TCs/chip


def _choose_tiles(B, S, H, dtype_bytes, target_bytes, want_core_split):
    sub = _sublane_multiple(dtype_bytes)

    # Prefer TH = H: fully contiguous DMA rows, n_h == 1, one finalize per batch.
    TH = H
    # On 2-TC chips guarantee B * n_h >= 2 so both cores get "parallel" work.
    if want_core_split and B == 1 and H >= 256 and H % 256 == 0:
        TH = H // 2
    # Only split H further if even a minimal-height S tile blows the budget.
    while TH * sub * dtype_bytes > target_bytes and TH % 256 == 0:
        TH //= 2

    # Fill the byte budget with the S tile, rounded to the sublane multiple.
    ts = (target_bytes // max(1, TH * dtype_bytes)) // sub * sub
    ts = max(sub, ts)
    if ts >= S:
        ts = S  # single tile covering the whole sequence (always layout-legal)
    return ts, TH


def mean_pooling(x, dim=1, tile_s=None, tile_h=None):
    """Pallas equivalent of MeanPooling.forward: x.mean(dim=dim, keepdim=True)."""
    assert dim == 1, "kernel implemented for dim=1 (sequence axis)"
    B, S, H = x.shape
    dtype_bytes = jnp.dtype(x.dtype).itemsize
    sub = _sublane_multiple(dtype_bytes)

    target_bytes, want_core_split = _device_tuning()
    TS, TH = _choose_tiles(B, S, H, dtype_bytes, target_bytes, want_core_split)

    # User overrides: round to layout-legal values instead of passing through.
    if tile_h is not None:
        TH = min(tile_h, H)
        if TH != H:
            TH = max(128, (TH // 128) * 128)          # lane-dense or full dim
    if tile_s is not None:
        TS = min(tile_s, S)
        if TS != S:
            TS = max(sub, pl.cdiv(TS, sub) * sub)     # dtype-aware sublane mult
            if TS >= S:
                TS = S

    n_s = pl.cdiv(S, TS)
    n_h = pl.cdiv(H, TH)
    mask_tail = (S % TS) != 0
    acc_rows = 8 if TS % 8 == 0 else 1

    kernel = functools.partial(
        _mean_pool_kernel, true_s=S, ts=TS, mask_tail=mask_tail, acc_rows=acc_rows
    )

    tile_bytes = TS * TH * dtype_bytes
    vmem_limit = min(64 << 20, max(32 << 20, 3 * tile_bytes + (4 << 20)))

    return pl.pallas_call(
        kernel,
        out_shape=jax.ShapeDtypeStruct((B, 1, H), x.dtype),
        grid_spec=pltpu.PrefetchScalarGridSpec(
            num_scalar_prefetch=0,
            grid=(B, n_h, n_s),                      # reduction axis (S) last
            in_specs=[pl.BlockSpec((1, TS, TH), lambda b, h, s: (b, s, h))],
            out_specs=pl.BlockSpec((1, 1, TH), lambda b, h, s: (b, 0, h)),
            scratch_shapes=[pltpu.VMEM((acc_rows, TH), jnp.float32)],
        ),
        compiler_params=pltpu.CompilerParams(
            dimension_semantics=("parallel", "parallel", "arbitrary"),
            vmem_limit_bytes=vmem_limit,
        ),
    )(x)


if __name__ == "__main__":
    key = jax.random.PRNGKey(0)

    # --- Test 1: small shape from the module spec (single-tile path) ---
    B, S, H = 2, 8, 32
    x = jax.random.normal(key, (B, S, H), dtype=jnp.float32)
    out = jax.block_until_ready(mean_pooling(x, dim=1))
    ref = jnp.mean(x, axis=1, keepdims=True)
    assert out.shape == (B, 1, H), out.shape
    assert out.dtype == x.dtype
    assert jnp.allclose(out, ref, atol=1e-6, rtol=1e-6)

    # --- Test 2: forced S-tiling with ragged tail (accumulator + tail mask) ---
    k2, k3, k4 = jax.random.split(key, 3)
    B2, S2, H2 = 2, 20, 32
    x2 = jax.random.normal(k2, (B2, S2, H2), dtype=jnp.float32)
    out2 = jax.block_until_ready(mean_pooling(x2, dim=1, tile_s=8))
    ref2 = jnp.mean(x2, axis=1, keepdims=True)
    assert out2.shape == (B2, 1, H2)
    assert jnp.allclose(out2, ref2, atol=1e-5, rtol=1e-5)

    # --- Test 3: bf16 input, f32 accumulation (tile_s rounded to 16 sublanes) ---
    x3 = jax.random.normal(k3, (B2, S2, H2), dtype=jnp.float32).astype(jnp.bfloat16)
    out3 = jax.block_until_ready(mean_pooling(x3, dim=1, tile_s=8))
    ref3 = jnp.mean(x3.astype(jnp.float32), axis=1, keepdims=True).astype(jnp.bfloat16)
    assert out3.dtype == jnp.bfloat16
    assert jnp.allclose(
        out3.astype(jnp.float32), ref3.astype(jnp.float32), atol=2e-2, rtol=2e-2
    )

    # --- Test 4: odd S, single-tile (acc_rows == 1 fallback path) ---
    x4 = jax.random.normal(k4, (2, 20, 32), dtype=jnp.float32)
    out4 = jax.block_until_ready(mean_pooling(x4, dim=1))
    ref4 = jnp.mean(x4, axis=1, keepdims=True)
    assert jnp.allclose(out4, ref4, atol=1e-5, rtol=1e-5)

    # --- Test 5: B=1 with H split into lane-dense tiles (n_h > 1 path) ---
    x5 = jax.random.normal(key, (1, 16, 256), dtype=jnp.float32)
    out5 = jax.block_until_ready(mean_pooling(x5, dim=1, tile_h=128))
    ref5 = jnp.mean(x5, axis=1, keepdims=True)
    assert out5.shape == (1, 1, 256)
    assert jnp.allclose(out5, ref5, atol=1e-6, rtol=1e-6)

    print("KERNEL_OK")
</pallas_src>

<mosaic_0001>
module attributes {stable_mosaic.version = 11 : i64} {
  func.func @_mean_pool_kernel(%arg0: i32, %arg1: i32, %arg2: i32, %arg3: memref<1x8x32xf32, #tpu.memory_space<vmem>>, %arg4: memref<1x1x32xf32, #tpu.memory_space<vmem>>, %arg5: memref<8x32xf32, #tpu.memory_space<vmem>>) attributes {dimension_semantics = [#tpu.dimension_semantics<parallel>, #tpu.dimension_semantics<parallel>, #tpu.dimension_semantics<arbitrary>], iteration_bounds = array<i64: 2, 1, 1>, scalar_prefetch = 0 : i64, scratch_operands = 1 : i64, tpu.core_type = #tpu.core_type<tc>, window_params = [{transform_indices = @transform_0, window_bounds = array<i64: 1, 8, 32>}, {transform_indices = @transform_1, window_bounds = array<i64: 1, 1, 32>}]} {
    %c0_i32 = arith.constant 0 : i32
    %0 = arith.cmpi eq, %arg2, %c0_i32 : i32
    %1 = arith.extui %0 : i1 to i32
    %c0_i32_0 = arith.constant 0 : i32
    %2 = arith.cmpi ne, %1, %c0_i32_0 : i32
    scf.if %2 {
      %cst_9 = arith.constant 0.000000e+00 : f32
      %13 = vector.broadcast %cst_9 : f32 to vector<8x32xf32>
      %c0_10 = arith.constant 0 : index
      %c0_11 = arith.constant 0 : index
      %14 = vector.load %arg5[%c0_10, %c0_11] : memref<8x32xf32, #tpu.memory_space<vmem>>, vector<8x32xf32>
      tpu.vector_store %arg5[%c0_10, %c0_11], %13 {strides = array<i32>} : memref<8x32xf32, #tpu.memory_space<vmem>>, vector<8x32xf32>,
    } else {
    }
    %c0 = arith.constant 0 : index
    %c0_1 = arith.constant 0 : index
    %c0_2 = arith.constant 0 : index
    %3 = vector.load %arg3[%c0, %c0_1, %c0_2] : memref<1x8x32xf32, #tpu.memory_space<vmem>>, vector<1x8x32xf32>
    %4 = vector.shape_cast %3 : vector<1x8x32xf32> to vector<8x32xf32>
    %c0_3 = arith.constant 0 : index
    %c0_4 = arith.constant 0 : index
    %5 = vector.load %arg5[%c0_3, %c0_4] : memref<8x32xf32, #tpu.memory_space<vmem>>, vector<8x32xf32>
    %6 = vector.shape_cast %4 : vector<8x32xf32> to vector<1x8x32xf32>
    %cst = arith.constant dense<0.000000e+00> : vector<8x32xf32>
    %7 = vector.multi_reduction <add>, %6, %cst [0] : vector<1x8x32xf32> to vector<8x32xf32>
    %8 = arith.addf %5, %7 : vector<8x32xf32>
    %c0_5 = arith.constant 0 : index
    %c0_6 = arith.constant 0 : index
    %9 = vector.load %arg5[%c0_5, %c0_6] : memref<8x32xf32, #tpu.memory_space<vmem>>, vector<8x32xf32>
    tpu.vector_store %arg5[%c0_5, %c0_6], %8 {strides = array<i32>} : memref<8x32xf32, #tpu.memory_space<vmem>>, vector<8x32xf32>,
    %c0_i32_7 = arith.constant 0 : i32
    %10 = arith.cmpi eq, %arg2, %c0_i32_7 : i32
    %11 = arith.extui %10 : i1 to i32
    %c0_i32_8 = arith.constant 0 : i32
    %12 = arith.cmpi ne, %11, %c0_i32_8 : i32
    scf.if %12 {
      %c0_9 = arith.constant 0 : index
      %c0_10 = arith.constant 0 : index
      %13 = vector.load %arg5[%c0_9, %c0_10] : memref<8x32xf32, #tpu.memory_space<vmem>>, vector<8x32xf32>
      %cst_11 = arith.constant dense<0.000000e+00> : vector<32xf32>
      %14 = vector.multi_reduction <add>, %13, %cst_11 [0] : vector<8x32xf32> to vector<32xf32>
      %15 = vector.shape_cast %14 : vector<32xf32> to vector<1x32xf32>
      %cst_12 = arith.constant 1.250000e-01 : f32
      %16 = vector.broadcast %cst_12 : f32 to vector<1x32xf32>
      %17 = arith.mulf %15, %16 : vector<1x32xf32>
      %18 = vector.shape_cast %17 : vector<1x32xf32> to vector<1x1x32xf32>
      %c0_13 = arith.constant 0 : index
      %c0_14 = arith.constant 0 : index
      %c0_15 = arith.constant 0 : index
      %19 = vector.load %arg4[%c0_13, %c0_14, %c0_15] : memref<1x1x32xf32, #tpu.memory_space<vmem>>, vector<1x1x32xf32>
      tpu.vector_store %arg4[%c0_13, %c0_14, %c0_15], %18 {strides = array<i32>} : memref<1x1x32xf32, #tpu.memory_space<vmem>>, vector<1x1x32xf32>,
    } else {
    }
    return
  }
  func.func @transform_0(%arg0: i32, %arg1: i32, %arg2: i32) -> (i32, i32, i32) {
    %c0_i32 = arith.constant 0 : i32
    return %arg0, %arg2, %arg1 : i32, i32, i32
  }
  func.func @transform_1(%arg0: i32, %arg1: i32, %arg2: i32) -> (i32, i32, i32) {
    %c0_i32 = arith.constant 0 : i32
    %c0_i32_0 = arith.constant 0 : i32
    return %arg0, %c0_i32, %arg1 : i32, i32, i32
  }
}

</mosaic_0001>

<llo_original>
// kernel: tpu_custom_call.1
$region0: #{tpu_custom_call.1}
  #allocation0 [shape = 'u32[]', space=smem, size = 0x4, offset = 0x4, fixed_abs, tag = 'smem constant byte address 0x4 - core index']
  #allocation1 [shape = 'u32[72,128]{1,0:T(1,128)}', space=vmem, size = 0x9000, scoped, tag = 'internal scratch']
  #allocation2 [shape = 'f32[8,32]{1,0:T(8,128)}', space=vmem, size = 0x1000, scoped, tag = 'scratch operand']
  %s0 = inlined_call_operand.hbm [shape: f32[2,8,32], index: 0, kind: input, shape index: {}]
  %s1 = inlined_call_operand.hbm [shape: f32[2,1,32], index: 1, kind: output, shape index: {}]
  %s2 = sld [smem:[#allocation0]]
  $region49: #{tpu_custom_call.1} parent=0
    _
  %s4 = ssub.s32 1, %s2
  %s5 = scalar_select 0, %s4, %s2
  $region1: #{tpu_custom_call.1} parent=0
    #allocation3 [shape = 'u8[8192]{0}', space=vmem, size = 0x2000, scoped, tag = 'input window, operand 0']
    #allocation4 [shape = 's32[2]{0}', space=sflag, size = 0x8, scoped, tag = 'scoped memory for tpu_custom_call.1']
    #allocation5 [shape = 's32[2]{0}', space=sflag, size = 0x8, scoped, tag = 'scoped memory for tpu_custom_call.1']
    #allocation6 [shape = 'u8[1024]{0}', space=vmem, size = 0x400, scoped, tag = 'output window, operand 0']
    %6 = vsyncpa [#allocation4], 0
    %s7 = scalar_lea.sflag [#allocation4], 1
    %8 = vsyncpa %s7, 0
    %9 = vsyncpa [#allocation5], 0
    %s10 = scalar_lea.sflag [#allocation5], 1
    %11 = vsyncpa %s10, 0
    loop: start=0, step=1, limit=4
    $region2: #{tpu_custom_call.1} parent=1 // loop_pre_header
      _
    $region3: #{tpu_custom_call.1} parent=1 // loop_header
      %s13 = sphi 0, %s17
      %p14 = scmp.ge.s32.totalorder %s13, 4
      %s20 = sphi 0, %s39
      %s21 = sphi 0, %s35
      %s22 = sphi 0, %s31
      %s23 = sphi 0, %s20
      %s24 = sphi 0, %s21
      %s25 = sphi 0, %s22
      %s26 = sphi 0, %s23
      %s27 = sphi 0, %s24
      %s28 = sphi 0, %s25
      %s46 = sphi 0, %s48
      %s49 = sphi 0, %s46
      %s50 = sphi 0, %s49
      %s66 = sphi 0, %s50
      %s74 = sphi 0, %s76
      %s77 = sphi 0, %s74
      %s78 = sphi 0, %s77
      %s94 = sphi 0, %s78
    $region4: #{tpu_custom_call.1} parent=1 // loop_header_branch
      %16 = sbr.rel (%p14) target = $region8
    $region5: #{tpu_custom_call.1} parent=1 // loop_body
      %s18 = ssub.s32 %s13, 1
      %s19 = ssub.s32 %s13, 2
      %s29 = sadd.s32 1, %s22
      %p30 = scmp.ge.s32.totalorder %s29, 1
      %s31 = scalar_select %p30, 0, %s29
      %s32 = sadd.s32 1, %s21
      %s33 = scalar_select %p30, %s32, %s21
      %p34 = scmp.ge.s32.totalorder %s33, 1
      %s35 = scalar_select %p34, 0, %s33
      %s36 = sadd.s32 1, %s20
      %s37 = scalar_select %p34, %s36, %s20
      %p38 = scmp.ge.s32.totalorder %s37, 2
      %s39 = scalar_select %p38, 0, %s37
      %s40 = ssub.s32 %s20, %s39
      %s41 = ssub.s32 %s22, %s31
      %s42 = sor.u32 %s40, %s41
      %s43 = ssub.s32 %s21, %s35
      %s44 = sor.u32 %s42, %s43
      %p45 = scmp.eq.s32.totalorder %s44, 0
      %s47 = sadd.s32 %s46, 1
      %s48 = scalar_select %p45, %s46, %s47
      %p51 = pneg %p45
      %p52 = scmp.eq.s32.totalorder %s13, 1
      %p53 = por %p51, %p52
      %p54 = scmp.ne.s32.totalorder %s46, %s49
      %p55 = scmp.eq.s32.totalorder %s13, 0
      %p56 = por %p54, %p55
      %p57 = scmp.ne.s32.totalorder %s46, %s49
      %p58 = scmp.eq.s32.totalorder %s18, 1
      %p59 = por %p57, %p58
      %p60 = scmp.ne.s32.totalorder %s49, %s50
      %p61 = scmp.eq.s32.totalorder %s18, 0
      %p62 = por %p60, %p61
      %p63 = scmp.ne.s32.totalorder %s49, %s50
      %p64 = scmp.eq.s32.totalorder %s19, 1
      %p65 = por %p63, %p64
      %p67 = scmp.ne.s32.totalorder %s50, %s66
      %p68 = scmp.eq.s32.totalorder %s19, 0
      %p69 = por %p67, %p68
      %s70 = ssub.s32 %s20, %s39
      %s71 = ssub.s32 %s21, %s35
      %s72 = sor.u32 %s70, %s71
      %p73 = scmp.eq.s32.totalorder %s72, 0
      %s75 = sadd.s32 %s74, 1
      %s76 = scalar_select %p73, %s74, %s75
      %p79 = pneg %p73
      %p80 = scmp.eq.s32.totalorder %s13, 1
      %p81 = por %p79, %p80
      %p82 = scmp.ne.s32.totalorder %s74, %s77
      %p83 = scmp.eq.s32.totalorder %s13, 0
      %p84 = por %p82, %p83
      %p85 = scmp.ne.s32.totalorder %s74, %s77
      %p86 = scmp.eq.s32.totalorder %s18, 1
      %p87 = por %p85, %p86
      %p88 = scmp.ne.s32.totalorder %s77, %s78
      %p89 = scmp.eq.s32.totalorder %s18, 0
      %p90 = por %p88, %p89
      %p91 = scmp.ne.s32.totalorder %s77, %s78
      %p92 = scmp.eq.s32.totalorder %s19, 1
      %p93 = por %p91, %p92
      %p95 = scmp.ne.s32.totalorder %s78, %s94
      %p96 = scmp.eq.s32.totalorder %s19, 0
      %p97 = por %p95, %p96
      %p98 = scmp.le.s32.totalorder 1, %s13
      %p99 = scmp.lt.s32.totalorder %s13, 3
      %p100 = pnand %p98, %p99
      %p101 = pneg %p100
      // Predicated region
      $region9: #{tpu_custom_call.1} parent=5 // pred_check
        _
      $region10: #{tpu_custom_call.1} parent=5 // pred_check_branch
        %103 = sbr.rel (%p100) target = $region12
      $region11: #{tpu_custom_call.1} parent=5 // pred_region
        %s104 = ssub.s32 %s13, 1
      $region12: #{tpu_custom_call.1} parent=5 // pred_fallthru
        _
      %p105 = scmp.lt.s32.totalorder %s13, 2
      // Predicated region
      $region13: #{tpu_custom_call.1} parent=5 // pred_check
        %p106 = pneg %p105
      $region14: #{tpu_custom_call.1} parent=5 // pred_check_branch
        %108 = sbr.rel (%p106) target = $region16
      $region15: #{tpu_custom_call.1} parent=5 // pred_region
        // Predicated region
        $region17: #{tpu_custom_call.1} parent=15 // pred_check
          %p109 = pneg %p56
        $region18: #{tpu_custom_call.1} parent=15 // pred_check_branch
          %111 = sbr.rel (%p109) target = $region20
        $region19: #{tpu_custom_call.1} parent=15 // pred_region
          %s112 = sand.u32 %s46, 1
          %s113 = scalar_lea.sflag [#allocation4], %s112
          %s114 = sand.u32 %s46, 1
          %s115 = smul.addr %s114, 8
          %s116 = scalar_lea.vmem [#allocation3], %s115
          %118 = vsyncadd %s113, 0
          %s119 = sadd.s32 %s21, %s22
          %s120 = sadd.s32 %s119, %s20
          %s121 = smul.addr %s120, 8
          %s122 = scalar_lea.hbm %s0, %s121
          %s124 = sshll.u32 %s122, 4
          %s125 = int_to_ptr.hbm [resolvable:$true] %s124
          %s126 = sshll.u32 %s116, 4
          %s127 = int_to_ptr.vmem [resolvable:$true] %s126
          %129 = dma.hbm_to_vmem [thread:$0]  %s125, 128, %s127, %s113
        $region20: #{tpu_custom_call.1} parent=15 // pred_fallthru
          _
      $region16: #{tpu_custom_call.1} parent=5 // pred_fallthru
        _
      %p130 = scmp.le.s32.totalorder 1, %s13
      %p131 = scmp.lt.s32.totalorder %s13, 3
      %p132 = pnand %p130, %p131
      %p133 = pneg %p132
      // Predicated region
      $region21: #{tpu_custom_call.1} parent=5 // pred_check
        _
      $region22: #{tpu_custom_call.1} parent=5 // pred_check_branch
        %135 = sbr.rel (%p132) target = $region24
      $region23: #{tpu_custom_call.1} parent=5 // pred_region
        %s136 = ssub.s32 %s13, 1
        %s137 = sand.u32 %s49, 1
        %s138 = scalar_lea.sflag [#allocation4], %s137
        %s139 = sand.u32 %s49, 1
        %s140 = smul.addr %s139, 8
        %s141 = scalar_lea.vmem [#allocation3], %s140
        // Predicated region
        $region25: #{tpu_custom_call.1} parent=23 // pred_check
          %p142 = pneg %p62
        $region26: #{tpu_custom_call.1} parent=23 // pred_check_branch
          %144 = sbr.rel (%p142) target = $region28
        $region27: #{tpu_custom_call.1} parent=23 // pred_region
          %146 = dma.done %s138, 128
        $region28: #{tpu_custom_call.1} parent=23 // pred_fallthru
          _
        %s147 = sand.u32 %s49, 1
        %s148 = scalar_lea.sflag [#allocation4], %s147
        %s149 = sand.u32 %s49, 1
        %s150 = smul.addr %s149, 8
        %s151 = scalar_lea.vmem [#allocation3], %s150
        %p152 = pneg %p62
        %p153 = pneg %p59
        %p154 = pneg %p90
        %p155 = pneg %p87
        %s156 = sand.u32 %s77, 1
        %s157 = scalar_lea.sflag [#allocation5], %s156
        %s158 = sand.u32 %s77, 1
        %s159 = scalar_lea.vmem [#allocation6], %s158
        %p160 = scmp.eq.s32.totalorder %s25, 0
        // Predicated region
        $region29: #{tpu_custom_call.1} parent=23 // pred_check
          %p161 = pneg %p160
        $region30: #{tpu_custom_call.1} parent=23 // pred_check_branch
          %163 = sbr.rel (%p161) target = $region32
        $region31: #{tpu_custom_call.1} parent=23 // pred_region
          %vm164 = vcmask 261120
          %165 = vst.msk [vmem:[#allocation2] sm:$0xff] %vm164, 0.0
        $region32: #{tpu_custom_call.1} parent=23 // pred_fallthru
          _
        %v166 = vld [vmem:[%s141] sm:$0xff]
        %v167 = vld [vmem:[#allocation2] sm:$0xff]
        %v168 = vadd.f32 %v166, 0.0
        %v169 = vadd.f32 %v167, %v168
        %vm170 = vcmask 261120
        %171 = vst.msk [vmem:[#allocation2] sm:$0xff] %vm170, %v169
        // Predicated region
        $region33: #{tpu_custom_call.1} parent=23 // pred_check
          %p172 = pneg %p160
        $region34: #{tpu_custom_call.1} parent=23 // pred_check_branch
          %174 = sbr.rel (%p172) target = $region36
        $region35: #{tpu_custom_call.1} parent=23 // pred_region
          %v175 = vld [vmem:[#allocation2] sm:$0xff]
          %v176 = vsel %vm170, %v175, 0.0
          %v177 = vrot.slane %v176, 4
          %v178 = vadd.f32 %v176, %v177
          %v179 = vrot.slane %v178, 2
          %v180 = vadd.f32 %v178, %v179
          %v181 = vrot.slane %v180, 1
          %v182 = vadd.f32 %v180, %v181
          %v183 = vmul.f32 %v182, 0.125
          %vm184 = vcmask 253952
          %185 = vst.msk [vmem:[%s159] sm:$0x1] %vm184, %v183
        $region36: #{tpu_custom_call.1} parent=23 // pred_fallthru
          _
        %s186 = sand.u32 %s77, 1
        %s187 = scalar_lea.sflag [#allocation5], %s186
        %s188 = sand.u32 %s77, 1
        %s189 = scalar_lea.vmem [#allocation6], %s188
        // Predicated region
        $region37: #{tpu_custom_call.1} parent=23 // pred_check
          %p190 = pneg %p87
        $region38: #{tpu_custom_call.1} parent=23 // pred_check_branch
          %192 = sbr.rel (%p190) target = $region40
        $region39: #{tpu_custom_call.1} parent=23 // pred_region
          %194 = vsyncadd %s187, 0
          %s195 = sadd.s32 %s24, %s23
          %s196 = scalar_lea.hbm %s1, %s195
          %s198 = sshll.u32 %s189, 4
          %s199 = int_to_ptr.vmem [resolvable:$true] %s198
          %s200 = sshll.u32 %s196, 4
          %s201 = int_to_ptr.hbm [resolvable:$true] %s200
          %203 = dma.vmem_to_hbm [thread:$0]  %s199, 16, %s201, %s187
        $region40: #{tpu_custom_call.1} parent=23 // pred_fallthru
          _
      $region24: #{tpu_custom_call.1} parent=5 // pred_fallthru
        _
      %p204 = scmp.le.s32.totalorder 2, %s13
      // Predicated region
      $region41: #{tpu_custom_call.1} parent=5 // pred_check
        %p205 = pneg %p204
      $region42: #{tpu_custom_call.1} parent=5 // pred_check_branch
        %207 = sbr.rel (%p205) target = $region44
      $region43: #{tpu_custom_call.1} parent=5 // pred_region
        %s208 = ssub.s32 %s13, 2
        // Predicated region
        $region45: #{tpu_custom_call.1} parent=43 // pred_check
          %p209 = pneg %p93
        $region46: #{tpu_custom_call.1} parent=43 // pred_check_branch
          %211 = sbr.rel (%p209) target = $region48
        $region47: #{tpu_custom_call.1} parent=43 // pred_region
          %s212 = sand.u32 %s78, 1
          %s213 = scalar_lea.sflag [#allocation5], %s212
          %s214 = sand.u32 %s78, 1
          %s215 = scalar_lea.vmem [#allocation6], %s214
          %217 = dma.done %s213, 16
        $region48: #{tpu_custom_call.1} parent=43 // pred_fallthru
          _
      $region44: #{tpu_custom_call.1} parent=5 // pred_fallthru
        _
    $region6: #{tpu_custom_call.1} parent=1 // loop_footer
      %s17 = sadd.s32 1, %s13
    $region7: #{tpu_custom_call.1} parent=1 // loop_footer_branch
      %12 = sbr.rel target = $region3
    $region8: #{tpu_custom_call.1} parent=1 // loop_exit
      _
    %218 = vsyncpa [#allocation4], 1
    %s219 = scalar_lea.sflag [#allocation4], 1
    %220 = vsyncpa %s219, 1
    %221 = vsyncpa [#allocation5], 1
    %s222 = scalar_lea.sflag [#allocation5], 1
    %223 = vsyncpa %s222, 1

</llo_original>
